<compile_context>
chip_gen: v5e
topology: v5e:2x2
jax: 0.10.0
libtpu: 0.0.40
codegen_flags: <defaults>
</compile_context>

<pallas_src>
import itertools

import jax
import jax.numpy as jnp
from jax.experimental import pallas as pl
from jax.experimental.pallas import tpu as pltpu


def generate_combinations(n: int) -> jnp.ndarray:
    """Matches the PyTorch helper: all {-1,1}^n combos, transposed -> (n, 2**n)."""
    combos = list(itertools.product([-1, 1], repeat=n))
    return jnp.asarray(combos, dtype=jnp.float32).T


def _add_with_carry_kernel(a_ref, bias_ref, tto_ref, xt_ref, o_ref):
    # a_ref:    (2^W, W)         = (2*cert*truthTableInputs)^T  (scale folded in)
    # bias_ref: (2^W, 1)         = -cert * colsum(truthTableInputs)
    # tto_ref:  (2^W, out_cols)  = truthTableOutputs
    # xt_ref:   (W, TILE_N)      = x^T tile (batch on the lane axis), input dtype
    # o_ref:    (out_cols, TILE_N) float32
    a = a_ref[...]
    bias = bias_ref[...]
    xt = xt_ref[...].astype(jnp.float32)
    two_w, w = a.shape
    tile_n = xt.shape[1]

    # logits^T = A @ x^T + bias.  K = W is tiny, so do it as W broadcast
    # mul-adds on the VPU instead of a >95%-padded MXU pass.
    logits = jnp.broadcast_to(bias, (two_w, tile_n))
    for k in range(w):                                   # static, unrolled
        logits = logits + a[:, k:k + 1] * xt[k:k + 1, :]

    # Numerically stable softmax numerator over the 2^W (sublane) axis.
    # (certainty is a learned parameter, so keep the max-subtraction.)
    m = jnp.max(logits, axis=0, keepdims=True)           # XLU sublane max
    e = jnp.exp(logits - m)                              # VPU sub + EUP exp
    s = jnp.sum(e, axis=0, keepdims=True)                # XLU sublane reduce

    # out^T[o, :] = (tto[:, o] . e) / s  — one VPU multiply + one XLU
    # sublane-reduce per output row; normalization applied afterwards on the
    # small (out_cols, TILE_N) result, exactly (no approx reciprocal).
    tto = tto_ref[...]
    out_cols = tto.shape[1]
    rows = []
    for o in range(out_cols):                            # static, unrolled
        rows.append(jnp.sum(e * tto[:, o:o + 1], axis=0, keepdims=True))
    acc = jnp.concatenate(rows, axis=0)                  # (out_cols, TILE_N)
    o_ref[...] = acc * (1.0 / s)


def add_with_carry_forward(x, truth_table_inputs, truth_table_outputs, certainty,
                           *, tile_n=32768):
    """x: (N, W). Returns (N, out_cols) float32, matching the PyTorch module."""
    n, w = x.shape
    two_w = truth_table_inputs.shape[1]
    out_cols = truth_table_outputs.shape[1]
    cert = jnp.asarray(certainty, jnp.float32).reshape(())

    # Fold the 2*(x-0.5) affine prescale and the certainty scale into tiny
    # constants (computed once, in plain JAX):
    #   logits^T = (2*cert*T_in)^T @ x^T  +  (-cert * colsum(T_in))
    a = (2.0 * cert * truth_table_inputs).T.astype(jnp.float32)        # (2^W, W)
    bias = (-cert * jnp.sum(truth_table_inputs, axis=0)).reshape(
        two_w, 1).astype(jnp.float32)                                  # (2^W, 1)
    tto = truth_table_outputs.astype(jnp.float32)                      # (2^W, out_cols)

    # Lane-dense layout: batch on the last (lane) axis.  Tile sizing:
    #   * round N up to a 128-lane multiple,
    #   * large default tile (32K) so the ~0.35us per-grid-step overhead is
    #     amortized (sweep 16K/32K/64K per chip; v5e prefers the low end),
    #   * when there is enough work and the grid would collapse to 1 step,
    #     split into >= 2 "parallel" steps (keeps both v7x TensorCores busy,
    #     near-free on single-core chips),
    #   * padding waste stays below one tile.
    n128 = -(-n // 128) * 128
    tile = min(tile_n, n128)
    if n128 >= 2048 and tile == n128:
        tile = max(128, ((n128 // 2) // 128) * 128)
    n_pad = -(-n128 // tile) * tile
    grid = (n_pad // tile,)

    # Keep x in its original dtype through the transpose/pad (halves the
    # input-side DMA for bf16 inputs); the kernel casts to f32 internally.
    # Padded columns are zero -> logits == bias, softmax stays finite, and the
    # padded outputs are sliced away below.
    xt = jnp.pad(x.T, ((0, 0), (0, n_pad - n)))                        # (W, N_pad)

    flops = (two_w * (2 * w + 3) + two_w * (2 * out_cols) + 3 * out_cols) * n_pad
    cost = pl.CostEstimate(
        flops=int(flops),
        transcendentals=two_w * n_pad,
        bytes_accessed=(x.dtype.itemsize * w + 4 * out_cols) * n_pad,
    )

    out_t = pl.pallas_call(
        _add_with_carry_kernel,
        out_shape=jax.ShapeDtypeStruct((out_cols, n_pad), jnp.float32),
        grid=grid,
        in_specs=[
            pl.BlockSpec((two_w, w), lambda i: (0, 0)),          # A (resident)
            pl.BlockSpec((two_w, 1), lambda i: (0, 0)),          # bias (resident)
            pl.BlockSpec((two_w, out_cols), lambda i: (0, 0)),   # T_out (resident)
            pl.BlockSpec((w, tile), lambda i: (0, i)),           # x^T tile
        ],
        out_specs=pl.BlockSpec((out_cols, tile), lambda i: (0, i)),
        compiler_params=pltpu.CompilerParams(
            dimension_semantics=("parallel",)),
        cost_estimate=cost,
    )(a, bias, tto, xt)

    # Back to the PyTorch-facing (N, out_cols) layout, dropping padding.
    return out_t[:, :n].T


if __name__ == "__main__":
    input_width = 3  # default truth table implies 2**3 = 8 rows

    # Deterministic parameter setup (matches __init__ with useDefault=True).
    truth_table_inputs = generate_combinations(input_width)          # (3, 8)
    truth_table_outputs = jnp.asarray(
        [[0, 0], [1, 0], [1, 0], [0, 1], [1, 0], [0, 1], [0, 1], [1, 1]],
        dtype=jnp.float32)                                           # (8, 2)
    certainty = jnp.ones((1,), dtype=jnp.float32) * 3.0              # nn.Parameter

    def reference(x):
        # High-precision pure-JAX reference.  HIGHEST precision is required:
        # the kernel does exact f32 math, while the default TPU matmul
        # precision (bf16 passes) would make the *reference* the sloppy side.
        xr = 2.0 * (x.astype(jnp.float32) - 0.5)
        logits = jnp.einsum("nw,wc->nc", xr, truth_table_inputs,
                            precision=jax.lax.Precision.HIGHEST) * certainty[0]
        probs = jax.nn.softmax(logits, axis=1)
        return jnp.einsum("nc,co->no", probs, truth_table_outputs,
                          precision=jax.lax.Precision.HIGHEST)

    key = jax.random.PRNGKey(0)

    # Small demo batch (shapes implied by the module).
    batch = 8
    x = jax.random.uniform(key, (batch, input_width), dtype=jnp.float32)
    out = add_with_carry_forward(x, truth_table_inputs, truth_table_outputs,
                                 certainty)
    out = jax.block_until_ready(out)
    assert out.shape == (batch, 2)
    assert jnp.allclose(out, reference(x), atol=1e-3, rtol=1e-3)

    # Non-multiple-of-128 batch: exercises padding + the multi-step "parallel"
    # grid path (2-way TensorCore split on v7x).
    batch2 = 2500
    x2 = jax.random.uniform(jax.random.PRNGKey(0), (batch2, input_width),
                            dtype=jnp.float32)
    out2 = jax.block_until_ready(
        add_with_carry_forward(x2, truth_table_inputs, truth_table_outputs,
                               certainty))
    assert out2.shape == (batch2, 2)
    assert jnp.allclose(out2, reference(x2), atol=1e-3, rtol=1e-3)

    print("KERNEL_OK")
</pallas_src>

<mosaic_0001>
module attributes {stable_mosaic.version = 11 : i64} {
  func.func @_add_with_carry_kernel(%arg0: i32, %arg1: memref<8x3xf32, #tpu.memory_space<vmem>>, %arg2: memref<8x1xf32, #tpu.memory_space<vmem>>, %arg3: memref<8x2xf32, #tpu.memory_space<vmem>>, %arg4: memref<3x128xf32, #tpu.memory_space<vmem>>, %arg5: memref<2x128xf32, #tpu.memory_space<vmem>>) attributes {dimension_semantics = [#tpu.dimension_semantics<parallel>], iteration_bounds = array<i64: 1>, scalar_prefetch = 0 : i64, scratch_operands = 0 : i64, tpu.core_type = #tpu.core_type<tc>, window_params = [{pipeline_mode = #tpu.pipeline_mode<synchronous>, transform_indices = @transform_0, window_bounds = array<i64: 8, 3>}, {pipeline_mode = #tpu.pipeline_mode<synchronous>, transform_indices = @transform_1, window_bounds = array<i64: 8, 1>}, {pipeline_mode = #tpu.pipeline_mode<synchronous>, transform_indices = @transform_2, window_bounds = array<i64: 8, 2>}, {transform_indices = @transform_3, window_bounds = array<i64: 3, 128>}, {transform_indices = @transform_4, window_bounds = array<i64: 2, 128>}]} {
    %c0 = arith.constant 0 : index
    %c0_0 = arith.constant 0 : index
    %0 = vector.load %arg1[%c0, %c0_0] : memref<8x3xf32, #tpu.memory_space<vmem>>, vector<8x3xf32>
    %c0_1 = arith.constant 0 : index
    %c0_2 = arith.constant 0 : index
    %1 = vector.load %arg2[%c0_1, %c0_2] : memref<8x1xf32, #tpu.memory_space<vmem>>, vector<8x1xf32>
    %c0_3 = arith.constant 0 : index
    %c0_4 = arith.constant 0 : index
    %2 = vector.load %arg4[%c0_3, %c0_4] : memref<3x128xf32, #tpu.memory_space<vmem>>, vector<3x128xf32>
    %3 = vector.shape_cast %1 : vector<8x1xf32> to vector<8x1xf32>
    %4 = vector.broadcast %3 : vector<8x1xf32> to vector<8x128xf32>
    %5 = vector.extract_strided_slice %0 {offsets = [0, 0], sizes = [8, 1], strides = [1, 1]} : vector<8x3xf32> to vector<8x1xf32>
    %6 = vector.extract_strided_slice %2 {offsets = [0, 0], sizes = [1, 128], strides = [1, 1]} : vector<3x128xf32> to vector<1x128xf32>
    %7 = vector.broadcast %5 : vector<8x1xf32> to vector<8x128xf32>
    %8 = vector.broadcast %6 : vector<1x128xf32> to vector<8x128xf32>
    %9 = arith.mulf %7, %8 : vector<8x128xf32>
    %10 = arith.addf %4, %9 : vector<8x128xf32>
    %11 = vector.extract_strided_slice %0 {offsets = [0, 1], sizes = [8, 1], strides = [1, 1]} : vector<8x3xf32> to vector<8x1xf32>
    %12 = vector.extract_strided_slice %2 {offsets = [1, 0], sizes = [1, 128], strides = [1, 1]} : vector<3x128xf32> to vector<1x128xf32>
    %13 = vector.broadcast %11 : vector<8x1xf32> to vector<8x128xf32>
    %14 = vector.broadcast %12 : vector<1x128xf32> to vector<8x128xf32>
    %15 = arith.mulf %13, %14 : vector<8x128xf32>
    %16 = arith.addf %10, %15 : vector<8x128xf32>
    %17 = vector.extract_strided_slice %0 {offsets = [0, 2], sizes = [8, 1], strides = [1, 1]} : vector<8x3xf32> to vector<8x1xf32>
    %18 = vector.extract_strided_slice %2 {offsets = [2, 0], sizes = [1, 128], strides = [1, 1]} : vector<3x128xf32> to vector<1x128xf32>
    %19 = vector.broadcast %17 : vector<8x1xf32> to vector<8x128xf32>
    %20 = vector.broadcast %18 : vector<1x128xf32> to vector<8x128xf32>
    %21 = arith.mulf %19, %20 : vector<8x128xf32>
    %22 = arith.addf %16, %21 : vector<8x128xf32>
    %cst = arith.constant dense<0xFF800000> : vector<128xf32>
    %23 = vector.multi_reduction <maximumf>, %22, %cst [0] : vector<8x128xf32> to vector<128xf32>
    %24 = vector.shape_cast %23 : vector<128xf32> to vector<1x128xf32>
    %25 = vector.broadcast %24 : vector<1x128xf32> to vector<8x128xf32>
    %26 = arith.subf %22, %25 : vector<8x128xf32>
    %27 = math.exp %26 : vector<8x128xf32>
    %cst_5 = arith.constant dense<0.000000e+00> : vector<128xf32>
    %28 = vector.multi_reduction <add>, %27, %cst_5 [0] : vector<8x128xf32> to vector<128xf32>
    %29 = vector.shape_cast %28 : vector<128xf32> to vector<1x128xf32>
    %c0_6 = arith.constant 0 : index
    %c0_7 = arith.constant 0 : index
    %30 = vector.load %arg3[%c0_6, %c0_7] : memref<8x2xf32, #tpu.memory_space<vmem>>, vector<8x2xf32>
    %31 = vector.extract_strided_slice %30 {offsets = [0, 0], sizes = [8, 1], strides = [1, 1]} : vector<8x2xf32> to vector<8x1xf32>
    %32 = vector.broadcast %31 : vector<8x1xf32> to vector<8x128xf32>
    %33 = arith.mulf %27, %32 : vector<8x128xf32>
    %cst_8 = arith.constant dense<0.000000e+00> : vector<128xf32>
    %34 = vector.multi_reduction <add>, %33, %cst_8 [0] : vector<8x128xf32> to vector<128xf32>
    %35 = vector.shape_cast %34 : vector<128xf32> to vector<1x128xf32>
    %36 = vector.extract_strided_slice %30 {offsets = [0, 1], sizes = [8, 1], strides = [1, 1]} : vector<8x2xf32> to vector<8x1xf32>
    %37 = vector.broadcast %36 : vector<8x1xf32> to vector<8x128xf32>
    %38 = arith.mulf %27, %37 : vector<8x128xf32>
    %cst_9 = arith.constant dense<0.000000e+00> : vector<128xf32>
    %39 = vector.multi_reduction <add>, %38, %cst_9 [0] : vector<8x128xf32> to vector<128xf32>
    %40 = vector.shape_cast %39 : vector<128xf32> to vector<1x128xf32>
    %41 = tpu.concatenate %35, %40 in 0 : vector<1x128xf32>, vector<1x128xf32> -> vector<2x128xf32>
    %cst_10 = arith.constant 1.000000e+00 : f32
    %42 = vector.broadcast %cst_10 : f32 to vector<1x128xf32>
    %43 = arith.divf %42, %29 : vector<1x128xf32>
    %44 = vector.broadcast %43 : vector<1x128xf32> to vector<2x128xf32>
    %45 = arith.mulf %41, %44 : vector<2x128xf32>
    %c0_11 = arith.constant 0 : index
    %c0_12 = arith.constant 0 : index
    %46 = vector.load %arg5[%c0_11, %c0_12] : memref<2x128xf32, #tpu.memory_space<vmem>>, vector<2x128xf32>
    tpu.vector_store %arg5[%c0_11, %c0_12], %45 {strides = array<i32>} : memref<2x128xf32, #tpu.memory_space<vmem>>, vector<2x128xf32>,
    return
  }
  func.func @transform_0(%arg0: i32) -> (i32, i32) {
    %c0_i32 = arith.constant 0 : i32
    %c0_i32_0 = arith.constant 0 : i32
    %c0_i32_1 = arith.constant 0 : i32
    return %c0_i32, %c0_i32_0 : i32, i32
  }
  func.func @transform_1(%arg0: i32) -> (i32, i32) {
    %c0_i32 = arith.constant 0 : i32
    %c0_i32_0 = arith.constant 0 : i32
    %c0_i32_1 = arith.constant 0 : i32
    return %c0_i32, %c0_i32_0 : i32, i32
  }
  func.func @transform_2(%arg0: i32) -> (i32, i32) {
    %c0_i32 = arith.constant 0 : i32
    %c0_i32_0 = arith.constant 0 : i32
    %c0_i32_1 = arith.constant 0 : i32
    return %c0_i32, %c0_i32_0 : i32, i32
  }
  func.func @transform_3(%arg0: i32) -> (i32, i32) {
    %c0_i32 = arith.constant 0 : i32
    %c0_i32_0 = arith.constant 0 : i32
    return %c0_i32, %arg0 : i32, i32
  }
  func.func @transform_4(%arg0: i32) -> (i32, i32) {
    %c0_i32 = arith.constant 0 : i32
    %c0_i32_0 = arith.constant 0 : i32
    return %c0_i32, %arg0 : i32, i32
  }
}

</mosaic_0001>

<llo_original>
// kernel: tpu_custom_call.1
$region0: #{tpu_custom_call.1}
  #allocation0 [shape = 'u32[]', space=smem, size = 0x4, offset = 0x4, fixed_abs, tag = 'smem constant byte address 0x4 - core index']
  #allocation1 [shape = 'u32[72,128]{1,0:T(1,128)}', space=vmem, size = 0x9000, scoped, tag = 'internal scratch']
  %s0 = inlined_call_operand.vmem [shape: f32[8,3], index: 0, kind: input, shape index: {}]
  %s1 = inlined_call_operand.vmem [shape: f32[8,1], index: 1, kind: input, shape index: {}]
  %s2 = inlined_call_operand.vmem [shape: f32[8,2], index: 2, kind: input, shape index: {}]
  %s3 = inlined_call_operand.vmem [shape: f32[3,128], index: 3, kind: input, shape index: {}]
  %s4 = inlined_call_operand.hbm [shape: f32[2,128], index: 4, kind: output, shape index: {}]
  %s5 = sld [smem:[#allocation0]]
  $region26: #{tpu_custom_call.1} parent=0
    _
  %s7 = ssub.s32 1, %s5
  %s8 = scalar_select 0, %s7, %s5
  $region1: #{tpu_custom_call.1} parent=0
    #allocation2 [shape = 'u8[1024]{0}', space=vmem, size = 0x400, scoped, tag = 'output window, operand 0, single buffered']
    #allocation3 [shape = 's32[1]{0}', space=sflag, size = 0x4, scoped, tag = 'scoped memory for tpu_custom_call.1']
    %9 = vsyncpa [#allocation3], 0
    // Predicated region
    $region2: #{tpu_custom_call.1} parent=1 // pred_check
      _
    $region3: #{tpu_custom_call.1} parent=1 // pred_check_branch
      %11 = sbr.rel (0) target = $region5
    $region4: #{tpu_custom_call.1} parent=1 // pred_region
      _
    $region5: #{tpu_custom_call.1} parent=1 // pred_fallthru
      _
    // Predicated region
    $region6: #{tpu_custom_call.1} parent=1 // pred_check
      _
    $region7: #{tpu_custom_call.1} parent=1 // pred_check_branch
      %13 = sbr.rel (0) target = $region9
    $region8: #{tpu_custom_call.1} parent=1 // pred_region
      _
    $region9: #{tpu_custom_call.1} parent=1 // pred_fallthru
      _
    // Predicated region
    $region10: #{tpu_custom_call.1} parent=1 // pred_check
      _
    $region11: #{tpu_custom_call.1} parent=1 // pred_check_branch
      %15 = sbr.rel (0) target = $region13
    $region12: #{tpu_custom_call.1} parent=1 // pred_region
      _
    $region13: #{tpu_custom_call.1} parent=1 // pred_fallthru
      _
    // Predicated region
    $region14: #{tpu_custom_call.1} parent=1 // pred_check
      _
    $region15: #{tpu_custom_call.1} parent=1 // pred_check_branch
      %17 = sbr.rel (0) target = $region17
    $region16: #{tpu_custom_call.1} parent=1 // pred_region
      _
    $region17: #{tpu_custom_call.1} parent=1 // pred_fallthru
      _
    %v18 = vld [vmem:[%s0] sm:$0xff]
    %v19 = vld [vmem:[%s1] sm:$0xff]
    %v20 = vld [vmem:[%s3] sm:$0x7]
    %22 = vset.pattern.permute.xlu0 0
    %23 = vperm.xlu0 %22, %v19
    %v24 = vpop.permute.xlu0 %23
    %27 = vset.pattern.permute.xlu0 0
    %28 = vperm.xlu0 %27, %v18
    %v29 = vpop.permute.xlu0 %28
    %v31 = vperm.slane %v20, 0
    %v32 = vmul.f32 %v29, %v31
    %v33 = vadd.f32 %v24, %v32
    %34 = vset.pattern.permute.xlu0 1
    %35 = vperm.xlu0 %34, %v18
    %v36 = vpop.permute.xlu0 %35
    %v38 = vperm.slane %v20, 1
    %v39 = vmul.f32 %v36, %v38
    %v40 = vadd.f32 %v33, %v39
    %41 = vset.pattern.permute.xlu0 2
    %42 = vperm.xlu0 %41, %v18
    %v43 = vpop.permute.xlu0 %42
    %v45 = vperm.slane %v20, 2
    %v46 = vmul.f32 %v43, %v45
    %v47 = vadd.f32 %v40, %v46
    %v48 = vrot.slane %v47, 4
    %v49 = vmax.f32 %v47, %v48
    %v50 = vrot.slane %v49, 2
    %v51 = vmax.f32 %v49, %v50
    %v52 = vrot.slane %v51, 1
    %v53 = vmax.f32 %v51, %v52
    %v54 = vsub.f32 %v47, %v53
    %v55 = vmul.f32 %v54, 1.442695
    %v56 = vpow.pop %v55
    %v57 = vrot.slane %v56, 4
    %v58 = vadd.f32 %v56, %v57
    %v59 = vrot.slane %v58, 2
    %v60 = vadd.f32 %v58, %v59
    %v61 = vrot.slane %v60, 1
    %v62 = vadd.f32 %v60, %v61
    %v63 = vld [vmem:[%s2] sm:$0xff]
    %65 = vset.pattern.permute.xlu0 0
    %66 = vperm.xlu0 %65, %v63
    %v67 = vpop.permute.xlu0 %66
    %v69 = vmul.f32 %v56, %v67
    %v70 = vrot.slane %v69, 4
    %v71 = vadd.f32 %v69, %v70
    %v72 = vrot.slane %v71, 2
    %v73 = vadd.f32 %v71, %v72
    %v74 = vrot.slane %v73, 1
    %v75 = vadd.f32 %v73, %v74
    %76 = vset.pattern.permute.xlu0 1
    %77 = vperm.xlu0 %76, %v63
    %v78 = vpop.permute.xlu0 %77
    %v80 = vmul.f32 %v56, %v78
    %v81 = vrot.slane %v80, 4
    %v82 = vadd.f32 %v80, %v81
    %v83 = vrot.slane %v82, 2
    %v84 = vadd.f32 %v82, %v83
    %v85 = vrot.slane %v84, 1
    %v86 = vadd.f32 %v84, %v85
    %vm87 = vcmask 1040384
    %v88 = vsel %vm87, %v75, %v86
    %v89 = vrcp.pop %v62
    %v90 = vmul.f32 %v62, %v89
    %v91 = vsub.f32 1.0, %v90
    %v92 = vmul.f32 %v89, %v91
    %v93 = vadd.f32 %v89, %v92
    %vm94 = vweird.f32 %v62
    %vm95 = vweird.f32 %v89
    %vm96 = vmor %vm94, %vm95
    %v97 = vsel %vm96, %v89, %v93
    %v98 = vand.u32 2147483647, %v62
    %vm99 = vcmp.eq.f32.partialorder %v98, 8.507059e+37
    %v100 = vand.u32 %v62, 2147483648
    %v101 = vor.u32 1.1754944e-38, %v100
    %v102 = vsel %vm99, %v101, %v97
    %v103 = vmul.f32 1.0, %v102
    %v104 = vmul.f32 %v88, %v103
    %105 = vst [vmem:[#allocation2] sm:$0x3] %v104
    // Predicated region
    $region18: #{tpu_custom_call.1} parent=1 // pred_check
      _
    $region19: #{tpu_custom_call.1} parent=1 // pred_check_branch
      %107 = sbr.rel (0) target = $region21
    $region20: #{tpu_custom_call.1} parent=1 // pred_region
      %109 = vsyncadd [#allocation3], 0
      %s111 = sshll.u32 [#allocation2], 4
      %s112 = int_to_ptr.vmem [resolvable:$true] %s111
      %s113 = sshll.u32 %s4, 4
      %s114 = int_to_ptr.hbm [resolvable:$true] %s113
      %116 = dma.vmem_to_hbm [thread:$0]  %s112, 32, %s114, [#allocation3]
    $region21: #{tpu_custom_call.1} parent=1 // pred_fallthru
      _
    // Predicated region
    $region22: #{tpu_custom_call.1} parent=1 // pred_check
      _
    $region23: #{tpu_custom_call.1} parent=1 // pred_check_branch
      %118 = sbr.rel (0) target = $region25
    $region24: #{tpu_custom_call.1} parent=1 // pred_region
      %120 = dma.done [#allocation3], 32
    $region25: #{tpu_custom_call.1} parent=1 // pred_fallthru
      _
    %121 = vsyncpa [#allocation3], 1

</llo_original>
